<compile_context>
chip_gen: v5e
topology: v5e:2x2
jax: 0.10.0
libtpu: 0.0.40
codegen_flags: <defaults>
</compile_context>

<pallas_src>
import jax
import jax.numpy as jnp
from jax import lax
from jax.experimental import pallas as pl
from jax.experimental.pallas import tpu as pltpu

HIDDEN = 10
LANES = 128
STRIP_ROWS = 64   # rows per in-kernel strip: (64,128) f32 = 8 vregs per live array


def mlp_kernel(params_ref, x_ref, o_ref):
    # params_ref (SMEM, f32[3*HIDDEN + 1]):
    #   [0:10]  w1 (hidden weights, Linear(1,10))
    #   [10:20] b1
    #   [20:30] w2 (output weights, Linear(10,1))
    #   [30]    b2
    w1 = [params_ref[j] for j in range(HIDDEN)]
    b1 = [params_ref[HIDDEN + j] for j in range(HIDDEN)]
    w2 = [params_ref[2 * HIDDEN + j] for j in range(HIDDEN)]
    b2 = params_ref[3 * HIDDEN]

    def block(x):
        # Two independent accumulator chains give the 4-wide VALU parallel work;
        # the output bias is folded into chain 0's first term (no separate splat).
        acc0 = jnp.maximum(x * w1[0] + b1[0], 0.0) * w2[0] + b2
        acc1 = jnp.maximum(x * w1[1] + b1[1], 0.0) * w2[1]
        for j in range(2, HIDDEN, 2):
            acc0 = acc0 + jnp.maximum(x * w1[j] + b1[j], 0.0) * w2[j]
            acc1 = acc1 + jnp.maximum(x * w1[j + 1] + b1[j + 1], 0.0) * w2[j + 1]
        return acc0 + acc1

    tile_rows = x_ref.shape[0]
    strip = min(STRIP_ROWS, tile_rows)
    n_full = tile_rows // strip
    rem = tile_rows - n_full * strip

    if n_full == 1 and rem == 0:
        # Small tile: process in one shot.
        o_ref[...] = block(x_ref[...]).astype(o_ref.dtype)
    else:
        # Strip-mine so the live set (x, acc0, acc1, one temp) stays well inside
        # the 64 vregs even for 4096-row tiles.
        def body(s, carry):
            r0 = pl.multiple_of(s * strip, strip)
            o_ref[pl.ds(r0, strip), :] = block(
                x_ref[pl.ds(r0, strip), :]).astype(o_ref.dtype)
            return carry

        lax.fori_loop(0, n_full, body, 0)
        if rem:  # static remainder strip (rem is a multiple of 8 here)
            r0 = n_full * strip
            o_ref[pl.ds(r0, rem), :] = block(
                x_ref[pl.ds(r0, rem), :]).astype(o_ref.dtype)


def _choose_tiling(rows, max_tile_rows):
    """Pick (tile_rows, num_tiles) for a (rows, 128) lane-dense slab."""
    if rows <= 256:
        # One small tile; block equals the full row extent (no (8,128) issue).
        return rows, 1
    # Keep the tile count even so the "parallel" batch axis can be split across
    # v7x's two TensorCores, and cap the tile at max_tile_rows.
    num_tiles = max(2, int(pl.cdiv(rows, max_tile_rows)))
    if num_tiles % 2:
        num_tiles += 1
    tile = int(pl.cdiv(rows, num_tiles))
    tile = ((tile + 7) // 8) * 8          # sublane-aligned block
    num_tiles = int(pl.cdiv(rows, tile))  # last grid block may be ragged: Pallas
    return tile, num_tiles                # clips OOB reads/writes at the edge


def neural_net_forward(x, w1, b1, w2, b2, *, tile_rows=4096):
    """x: (B, 1) f32; w1: (1, 10); b1: (10,); w2: (10, 1); b2: (1,).

    Weights are in (in, out) layout (i.e. PyTorch weights pre-transposed).
    """
    B = x.shape[0]

    # Collapse the 31 parameters into one SMEM-resident vector (single tiny DMA).
    params = jnp.concatenate(
        [w1.reshape(-1), b1.reshape(-1), w2.reshape(-1), b2.reshape(-1)]
    ).astype(jnp.float32)                            # (31,)

    # Lane-dense layout with minimal padding: only pad to the next 128 boundary
    # (a no-op copy when B % 128 == 0); the reshape itself is a free bitcast.
    xf = x.reshape(-1).astype(jnp.float32)
    b_pad = int(pl.cdiv(B, LANES)) * LANES
    if b_pad != B:
        xf = jnp.pad(xf, (0, b_pad - B))
    rows = b_pad // LANES
    xp = xf.reshape(rows, LANES)

    tile, num_tiles = _choose_tiling(rows, tile_rows)

    out = pl.pallas_call(
        mlp_kernel,
        out_shape=jax.ShapeDtypeStruct((rows, LANES), jnp.float32),
        grid_spec=pltpu.PrefetchScalarGridSpec(
            num_scalar_prefetch=1,                   # params -> SMEM, loaded once
            grid=(num_tiles,),
            in_specs=[pl.BlockSpec((tile, LANES), lambda i, p: (i, 0))],
            out_specs=pl.BlockSpec((tile, LANES), lambda i, p: (i, 0)),
        ),
        compiler_params=pltpu.CompilerParams(
            dimension_semantics=("parallel",),       # batch tiles independent
        ),
    )(params, xp)

    # Back to the PyTorch (B, 1) layout (free when B % 128 == 0).
    y = out.reshape(-1)
    if b_pad != B:
        y = y[:B]
    return y.reshape(B, 1)


def init_params(key):
    """Deterministic init mirroring nn.Linear shapes.

    hidden: Linear(1, 10)  -> weight (10, 1), bias (10,)
    output: Linear(10, 1)  -> weight (1, 10), bias (1,)
    Returns already-transposed (in, out) weights used by the kernel/wrapper.
    """
    k1, k2, k3, k4 = jax.random.split(key, 4)
    bound1 = 1.0 / jnp.sqrt(1.0)
    w_hidden = jax.random.uniform(k1, (10, 1), jnp.float32, -bound1, bound1)
    b_hidden = jax.random.uniform(k2, (10,), jnp.float32, -bound1, bound1)
    bound2 = 1.0 / jnp.sqrt(10.0)
    w_output = jax.random.uniform(k3, (1, 10), jnp.float32, -bound2, bound2)
    b_output = jax.random.uniform(k4, (1,), jnp.float32, -bound2, bound2)
    return w_hidden.T, b_hidden, w_output.T, b_output


if __name__ == "__main__":
    key = jax.random.PRNGKey(0)
    kx1, kx2, kx3, kp = jax.random.split(key, 4)

    w1, b1, w2, b2 = init_params(kp)

    def reference(x):
        h = jnp.maximum(x @ w1 + b1[None, :], 0.0)
        return h @ w2 + b2[None, :]

    cases = [
        ("tiny", 8, kx1),          # single (1,128) tile, mostly padding
        ("ragged-pad", 200, kx2),  # B % 128 != 0 -> last-128 tail padded only
        ("multi-tile", 83200, kx3) # rows=650: 2 tiles, ragged last grid block,
                                   # in-kernel strip loop + remainder strip
    ]
    for name, B, kx in cases:
        x = jax.random.normal(kx, (B, 1), dtype=jnp.float32)
        out = jax.block_until_ready(neural_net_forward(x, w1, b1, w2, b2))
        assert out.shape == (B, 1), f"bad shape for {name}"
        assert jnp.allclose(out, reference(x), atol=1e-5), \
            f"mismatch vs reference ({name}, B={B})"

    print("KERNEL_OK")
</pallas_src>

<mosaic_0001>
module attributes {stable_mosaic.version = 11 : i64} {
  func.func @mlp_kernel(%arg0: i32, %arg1: memref<31xf32, #tpu.memory_space<smem>>, %arg2: memref<1x128xf32, #tpu.memory_space<vmem>>, %arg3: memref<1x128xf32, #tpu.memory_space<vmem>>) attributes {dimension_semantics = [#tpu.dimension_semantics<parallel>], iteration_bounds = array<i64: 1>, scalar_prefetch = 1 : i64, scratch_operands = 0 : i64, tpu.core_type = #tpu.core_type<tc>, window_params = [{transform_indices = @transform_0, window_bounds = array<i64: 1, 128>}, {transform_indices = @transform_1, window_bounds = array<i64: 1, 128>}]} {
    %c0 = arith.constant 0 : index
    %0 = memref.load %arg1[%c0] : memref<31xf32, #tpu.memory_space<smem>>
    %c1 = arith.constant 1 : index
    %1 = memref.load %arg1[%c1] : memref<31xf32, #tpu.memory_space<smem>>
    %c2 = arith.constant 2 : index
    %2 = memref.load %arg1[%c2] : memref<31xf32, #tpu.memory_space<smem>>
    %c3 = arith.constant 3 : index
    %3 = memref.load %arg1[%c3] : memref<31xf32, #tpu.memory_space<smem>>
    %c4 = arith.constant 4 : index
    %4 = memref.load %arg1[%c4] : memref<31xf32, #tpu.memory_space<smem>>
    %c5 = arith.constant 5 : index
    %5 = memref.load %arg1[%c5] : memref<31xf32, #tpu.memory_space<smem>>
    %c6 = arith.constant 6 : index
    %6 = memref.load %arg1[%c6] : memref<31xf32, #tpu.memory_space<smem>>
    %c7 = arith.constant 7 : index
    %7 = memref.load %arg1[%c7] : memref<31xf32, #tpu.memory_space<smem>>
    %c8 = arith.constant 8 : index
    %8 = memref.load %arg1[%c8] : memref<31xf32, #tpu.memory_space<smem>>
    %c9 = arith.constant 9 : index
    %9 = memref.load %arg1[%c9] : memref<31xf32, #tpu.memory_space<smem>>
    %c10 = arith.constant 10 : index
    %10 = memref.load %arg1[%c10] : memref<31xf32, #tpu.memory_space<smem>>
    %c11 = arith.constant 11 : index
    %11 = memref.load %arg1[%c11] : memref<31xf32, #tpu.memory_space<smem>>
    %c12 = arith.constant 12 : index
    %12 = memref.load %arg1[%c12] : memref<31xf32, #tpu.memory_space<smem>>
    %c13 = arith.constant 13 : index
    %13 = memref.load %arg1[%c13] : memref<31xf32, #tpu.memory_space<smem>>
    %c14 = arith.constant 14 : index
    %14 = memref.load %arg1[%c14] : memref<31xf32, #tpu.memory_space<smem>>
    %c15 = arith.constant 15 : index
    %15 = memref.load %arg1[%c15] : memref<31xf32, #tpu.memory_space<smem>>
    %c16 = arith.constant 16 : index
    %16 = memref.load %arg1[%c16] : memref<31xf32, #tpu.memory_space<smem>>
    %c17 = arith.constant 17 : index
    %17 = memref.load %arg1[%c17] : memref<31xf32, #tpu.memory_space<smem>>
    %c18 = arith.constant 18 : index
    %18 = memref.load %arg1[%c18] : memref<31xf32, #tpu.memory_space<smem>>
    %c19 = arith.constant 19 : index
    %19 = memref.load %arg1[%c19] : memref<31xf32, #tpu.memory_space<smem>>
    %c20 = arith.constant 20 : index
    %20 = memref.load %arg1[%c20] : memref<31xf32, #tpu.memory_space<smem>>
    %c21 = arith.constant 21 : index
    %21 = memref.load %arg1[%c21] : memref<31xf32, #tpu.memory_space<smem>>
    %c22 = arith.constant 22 : index
    %22 = memref.load %arg1[%c22] : memref<31xf32, #tpu.memory_space<smem>>
    %c23 = arith.constant 23 : index
    %23 = memref.load %arg1[%c23] : memref<31xf32, #tpu.memory_space<smem>>
    %c24 = arith.constant 24 : index
    %24 = memref.load %arg1[%c24] : memref<31xf32, #tpu.memory_space<smem>>
    %c25 = arith.constant 25 : index
    %25 = memref.load %arg1[%c25] : memref<31xf32, #tpu.memory_space<smem>>
    %c26 = arith.constant 26 : index
    %26 = memref.load %arg1[%c26] : memref<31xf32, #tpu.memory_space<smem>>
    %c27 = arith.constant 27 : index
    %27 = memref.load %arg1[%c27] : memref<31xf32, #tpu.memory_space<smem>>
    %c28 = arith.constant 28 : index
    %28 = memref.load %arg1[%c28] : memref<31xf32, #tpu.memory_space<smem>>
    %c29 = arith.constant 29 : index
    %29 = memref.load %arg1[%c29] : memref<31xf32, #tpu.memory_space<smem>>
    %c30 = arith.constant 30 : index
    %30 = memref.load %arg1[%c30] : memref<31xf32, #tpu.memory_space<smem>>
    %c0_0 = arith.constant 0 : index
    %c0_1 = arith.constant 0 : index
    %31 = vector.load %arg2[%c0_0, %c0_1] : memref<1x128xf32, #tpu.memory_space<vmem>>, vector<1x128xf32>
    %32 = vector.broadcast %0 : f32 to vector<1x128xf32>
    %33 = arith.mulf %31, %32 : vector<1x128xf32>
    %34 = vector.broadcast %10 : f32 to vector<1x128xf32>
    %35 = arith.addf %33, %34 : vector<1x128xf32>
    %cst = arith.constant 0.000000e+00 : f32
    %36 = vector.broadcast %cst : f32 to vector<1x128xf32>
    %37 = arith.maximumf %35, %36 : vector<1x128xf32>
    %38 = vector.broadcast %20 : f32 to vector<1x128xf32>
    %39 = arith.mulf %37, %38 : vector<1x128xf32>
    %40 = vector.broadcast %30 : f32 to vector<1x128xf32>
    %41 = arith.addf %39, %40 : vector<1x128xf32>
    %42 = vector.broadcast %1 : f32 to vector<1x128xf32>
    %43 = arith.mulf %31, %42 : vector<1x128xf32>
    %44 = vector.broadcast %11 : f32 to vector<1x128xf32>
    %45 = arith.addf %43, %44 : vector<1x128xf32>
    %cst_2 = arith.constant 0.000000e+00 : f32
    %46 = vector.broadcast %cst_2 : f32 to vector<1x128xf32>
    %47 = arith.maximumf %45, %46 : vector<1x128xf32>
    %48 = vector.broadcast %21 : f32 to vector<1x128xf32>
    %49 = arith.mulf %47, %48 : vector<1x128xf32>
    %50 = vector.broadcast %2 : f32 to vector<1x128xf32>
    %51 = arith.mulf %31, %50 : vector<1x128xf32>
    %52 = vector.broadcast %12 : f32 to vector<1x128xf32>
    %53 = arith.addf %51, %52 : vector<1x128xf32>
    %cst_3 = arith.constant 0.000000e+00 : f32
    %54 = vector.broadcast %cst_3 : f32 to vector<1x128xf32>
    %55 = arith.maximumf %53, %54 : vector<1x128xf32>
    %56 = vector.broadcast %22 : f32 to vector<1x128xf32>
    %57 = arith.mulf %55, %56 : vector<1x128xf32>
    %58 = arith.addf %41, %57 : vector<1x128xf32>
    %59 = vector.broadcast %3 : f32 to vector<1x128xf32>
    %60 = arith.mulf %31, %59 : vector<1x128xf32>
    %61 = vector.broadcast %13 : f32 to vector<1x128xf32>
    %62 = arith.addf %60, %61 : vector<1x128xf32>
    %cst_4 = arith.constant 0.000000e+00 : f32
    %63 = vector.broadcast %cst_4 : f32 to vector<1x128xf32>
    %64 = arith.maximumf %62, %63 : vector<1x128xf32>
    %65 = vector.broadcast %23 : f32 to vector<1x128xf32>
    %66 = arith.mulf %64, %65 : vector<1x128xf32>
    %67 = arith.addf %49, %66 : vector<1x128xf32>
    %68 = vector.broadcast %4 : f32 to vector<1x128xf32>
    %69 = arith.mulf %31, %68 : vector<1x128xf32>
    %70 = vector.broadcast %14 : f32 to vector<1x128xf32>
    %71 = arith.addf %69, %70 : vector<1x128xf32>
    %cst_5 = arith.constant 0.000000e+00 : f32
    %72 = vector.broadcast %cst_5 : f32 to vector<1x128xf32>
    %73 = arith.maximumf %71, %72 : vector<1x128xf32>
    %74 = vector.broadcast %24 : f32 to vector<1x128xf32>
    %75 = arith.mulf %73, %74 : vector<1x128xf32>
    %76 = arith.addf %58, %75 : vector<1x128xf32>
    %77 = vector.broadcast %5 : f32 to vector<1x128xf32>
    %78 = arith.mulf %31, %77 : vector<1x128xf32>
    %79 = vector.broadcast %15 : f32 to vector<1x128xf32>
    %80 = arith.addf %78, %79 : vector<1x128xf32>
    %cst_6 = arith.constant 0.000000e+00 : f32
    %81 = vector.broadcast %cst_6 : f32 to vector<1x128xf32>
    %82 = arith.maximumf %80, %81 : vector<1x128xf32>
    %83 = vector.broadcast %25 : f32 to vector<1x128xf32>
    %84 = arith.mulf %82, %83 : vector<1x128xf32>
    %85 = arith.addf %67, %84 : vector<1x128xf32>
    %86 = vector.broadcast %6 : f32 to vector<1x128xf32>
    %87 = arith.mulf %31, %86 : vector<1x128xf32>
    %88 = vector.broadcast %16 : f32 to vector<1x128xf32>
    %89 = arith.addf %87, %88 : vector<1x128xf32>
    %cst_7 = arith.constant 0.000000e+00 : f32
    %90 = vector.broadcast %cst_7 : f32 to vector<1x128xf32>
    %91 = arith.maximumf %89, %90 : vector<1x128xf32>
    %92 = vector.broadcast %26 : f32 to vector<1x128xf32>
    %93 = arith.mulf %91, %92 : vector<1x128xf32>
    %94 = arith.addf %76, %93 : vector<1x128xf32>
    %95 = vector.broadcast %7 : f32 to vector<1x128xf32>
    %96 = arith.mulf %31, %95 : vector<1x128xf32>
    %97 = vector.broadcast %17 : f32 to vector<1x128xf32>
    %98 = arith.addf %96, %97 : vector<1x128xf32>
    %cst_8 = arith.constant 0.000000e+00 : f32
    %99 = vector.broadcast %cst_8 : f32 to vector<1x128xf32>
    %100 = arith.maximumf %98, %99 : vector<1x128xf32>
    %101 = vector.broadcast %27 : f32 to vector<1x128xf32>
    %102 = arith.mulf %100, %101 : vector<1x128xf32>
    %103 = arith.addf %85, %102 : vector<1x128xf32>
    %104 = vector.broadcast %8 : f32 to vector<1x128xf32>
    %105 = arith.mulf %31, %104 : vector<1x128xf32>
    %106 = vector.broadcast %18 : f32 to vector<1x128xf32>
    %107 = arith.addf %105, %106 : vector<1x128xf32>
    %cst_9 = arith.constant 0.000000e+00 : f32
    %108 = vector.broadcast %cst_9 : f32 to vector<1x128xf32>
    %109 = arith.maximumf %107, %108 : vector<1x128xf32>
    %110 = vector.broadcast %28 : f32 to vector<1x128xf32>
    %111 = arith.mulf %109, %110 : vector<1x128xf32>
    %112 = arith.addf %94, %111 : vector<1x128xf32>
    %113 = vector.broadcast %9 : f32 to vector<1x128xf32>
    %114 = arith.mulf %31, %113 : vector<1x128xf32>
    %115 = vector.broadcast %19 : f32 to vector<1x128xf32>
    %116 = arith.addf %114, %115 : vector<1x128xf32>
    %cst_10 = arith.constant 0.000000e+00 : f32
    %117 = vector.broadcast %cst_10 : f32 to vector<1x128xf32>
    %118 = arith.maximumf %116, %117 : vector<1x128xf32>
    %119 = vector.broadcast %29 : f32 to vector<1x128xf32>
    %120 = arith.mulf %118, %119 : vector<1x128xf32>
    %121 = arith.addf %103, %120 : vector<1x128xf32>
    %122 = arith.addf %112, %121 : vector<1x128xf32>
    %c0_11 = arith.constant 0 : index
    %c0_12 = arith.constant 0 : index
    %123 = vector.load %arg3[%c0_11, %c0_12] : memref<1x128xf32, #tpu.memory_space<vmem>>, vector<1x128xf32>
    tpu.vector_store %arg3[%c0_11, %c0_12], %122 {strides = array<i32>} : memref<1x128xf32, #tpu.memory_space<vmem>>, vector<1x128xf32>,
    return
  }
  func.func @transform_0(%arg0: i32, %arg1: memref<31xf32, #tpu.memory_space<smem>>) -> (i32, i32) {
    %c0_i32 = arith.constant 0 : i32
    %c0_i32_0 = arith.constant 0 : i32
    return %arg0, %c0_i32 : i32, i32
  }
  func.func @transform_1(%arg0: i32, %arg1: memref<31xf32, #tpu.memory_space<smem>>) -> (i32, i32) {
    %c0_i32 = arith.constant 0 : i32
    %c0_i32_0 = arith.constant 0 : i32
    return %arg0, %c0_i32 : i32, i32
  }
}

</mosaic_0001>

<llo_original>
// kernel: tpu_custom_call.1
$region0: #{tpu_custom_call.1}
  #allocation0 [shape = 'u32[]', space=smem, size = 0x4, offset = 0x4, fixed_abs, tag = 'smem constant byte address 0x4 - core index']
  #allocation1 [shape = 'u32[72,128]{1,0:T(1,128)}', space=vmem, size = 0x9000, scoped, tag = 'internal scratch']
  #allocation2 [shape = 's32[1]{0}', space=sflag, size = 0x4, scoped, tag = 'scoped memory for tpu_custom_call.1']
  #allocation3 [shape = 'u8[512]{0}', space=smem, size = 0x200, scoped, tag = 'prefetched SMEM operand 0']
  %s0 = inlined_call_operand.hbm [shape: f32[31], index: 0, kind: input, shape index: {}]
  %s1 = inlined_call_operand.hbm [shape: f32[1,128], index: 1, kind: input, shape index: {}]
  %s2 = inlined_call_operand.hbm [shape: f32[1,128], index: 2, kind: output, shape index: {}]
  %s3 = sld [smem:[#allocation0]]
  $region18: #{tpu_custom_call.1} parent=0
    _
  %s5 = ssub.s32 1, %s3
  %s6 = scalar_select 0, %s5, %s3
  %s8 = sshll.u32 %s0, 4
  %s9 = int_to_ptr.hbm [resolvable:$true] %s8
  %11 = dma.hbm_to_smem %s9, 16, [#allocation3], [#allocation2]
  %13 = dma.done [#allocation2], 16
  %14 = sfence
  $region1: #{tpu_custom_call.1} parent=0
    #allocation4 [shape = 'u8[512]{0}', space=vmem, size = 0x400, scoped, tag = 'input window, operand 1, single buffered']
    #allocation5 [shape = 's32[1]{0}', space=sflag, size = 0x4, scoped, tag = 'scoped memory for tpu_custom_call.1']
    #allocation6 [shape = 's32[1]{0}', space=sflag, size = 0x4, scoped, tag = 'scoped memory for tpu_custom_call.1']
    #allocation7 [shape = 'u8[512]{0}', space=vmem, size = 0x400, scoped, tag = 'output window, operand 0, single buffered']
    %15 = vsyncpa [#allocation5], 0
    %16 = vsyncpa [#allocation6], 0
    // Predicated region
    $region2: #{tpu_custom_call.1} parent=1 // pred_check
      _
    $region3: #{tpu_custom_call.1} parent=1 // pred_check_branch
      %18 = sbr.rel (0) target = $region5
    $region4: #{tpu_custom_call.1} parent=1 // pred_region
      %20 = vsyncadd [#allocation5], 0
      %s22 = sshll.u32 %s1, 4
      %s23 = int_to_ptr.hbm [resolvable:$true] %s22
      %s24 = sshll.u32 [#allocation4], 4
      %s25 = int_to_ptr.vmem [resolvable:$true] %s24
      %27 = dma.hbm_to_vmem [thread:$0]  %s23, 16, %s25, [#allocation5]
    $region5: #{tpu_custom_call.1} parent=1 // pred_fallthru
      _
    // Predicated region
    $region6: #{tpu_custom_call.1} parent=1 // pred_check
      _
    $region7: #{tpu_custom_call.1} parent=1 // pred_check_branch
      %29 = sbr.rel (0) target = $region9
    $region8: #{tpu_custom_call.1} parent=1 // pred_region
      %31 = dma.done [#allocation5], 16
    $region9: #{tpu_custom_call.1} parent=1 // pred_fallthru
      _
    %s32 = sld [smem:[#allocation3]]
    %s33 = sld [smem:[#allocation3 + $0x1]]
    %s34 = sld [smem:[#allocation3 + $0x2]]
    %s35 = sld [smem:[#allocation3 + $0x3]]
    %s36 = sld [smem:[#allocation3 + $0x4]]
    %s37 = sld [smem:[#allocation3 + $0x5]]
    %s38 = sld [smem:[#allocation3 + $0x6]]
    %s39 = sld [smem:[#allocation3 + $0x7]]
    %s40 = sld [smem:[#allocation3 + $0x8]]
    %s41 = sld [smem:[#allocation3 + $0x9]]
    %s42 = sld [smem:[#allocation3 + $0xa]]
    %s43 = sld [smem:[#allocation3 + $0xb]]
    %s44 = sld [smem:[#allocation3 + $0xc]]
    %s45 = sld [smem:[#allocation3 + $0xd]]
    %s46 = sld [smem:[#allocation3 + $0xe]]
    %s47 = sld [smem:[#allocation3 + $0xf]]
    %s48 = sld [smem:[#allocation3 + $0x10]]
    %s49 = sld [smem:[#allocation3 + $0x11]]
    %s50 = sld [smem:[#allocation3 + $0x12]]
    %s51 = sld [smem:[#allocation3 + $0x13]]
    %s52 = sld [smem:[#allocation3 + $0x14]]
    %s53 = sld [smem:[#allocation3 + $0x15]]
    %s54 = sld [smem:[#allocation3 + $0x16]]
    %s55 = sld [smem:[#allocation3 + $0x17]]
    %s56 = sld [smem:[#allocation3 + $0x18]]
    %s57 = sld [smem:[#allocation3 + $0x19]]
    %s58 = sld [smem:[#allocation3 + $0x1a]]
    %s59 = sld [smem:[#allocation3 + $0x1b]]
    %s60 = sld [smem:[#allocation3 + $0x1c]]
    %s61 = sld [smem:[#allocation3 + $0x1d]]
    %s62 = sld [smem:[#allocation3 + $0x1e]]
    %v63 = vld [vmem:[#allocation4] sm:$0x1]
    %v64 = vstv %s32
    %v65 = vmul.f32 %v63, %v64
    %v66 = vstv %s42
    %v67 = vadd.f32 %v65, %v66
    %v68 = vmax.f32 %v67, 0.0
    %v69 = vstv %s52
    %v70 = vmul.f32 %v68, %v69
    %v71 = vstv %s62
    %v72 = vadd.f32 %v70, %v71
    %v73 = vstv %s33
    %v74 = vmul.f32 %v63, %v73
    %v75 = vstv %s43
    %v76 = vadd.f32 %v74, %v75
    %v77 = vmax.f32 %v76, 0.0
    %v78 = vstv %s53
    %v79 = vmul.f32 %v77, %v78
    %v80 = vstv %s34
    %v81 = vmul.f32 %v63, %v80
    %v82 = vstv %s44
    %v83 = vadd.f32 %v81, %v82
    %v84 = vmax.f32 %v83, 0.0
    %v85 = vstv %s54
    %v86 = vmul.f32 %v84, %v85
    %v87 = vadd.f32 %v72, %v86
    %v88 = vstv %s35
    %v89 = vmul.f32 %v63, %v88
    %v90 = vstv %s45
    %v91 = vadd.f32 %v89, %v90
    %v92 = vmax.f32 %v91, 0.0
    %v93 = vstv %s55
    %v94 = vmul.f32 %v92, %v93
    %v95 = vadd.f32 %v79, %v94
    %v96 = vstv %s36
    %v97 = vmul.f32 %v63, %v96
    %v98 = vstv %s46
    %v99 = vadd.f32 %v97, %v98
    %v100 = vmax.f32 %v99, 0.0
    %v101 = vstv %s56
    %v102 = vmul.f32 %v100, %v101
    %v103 = vadd.f32 %v87, %v102
    %v104 = vstv %s37
    %v105 = vmul.f32 %v63, %v104
    %v106 = vstv %s47
    %v107 = vadd.f32 %v105, %v106
    %v108 = vmax.f32 %v107, 0.0
    %v109 = vstv %s57
    %v110 = vmul.f32 %v108, %v109
    %v111 = vadd.f32 %v95, %v110
    %v112 = vstv %s38
    %v113 = vmul.f32 %v63, %v112
    %v114 = vstv %s48
    %v115 = vadd.f32 %v113, %v114
    %v116 = vmax.f32 %v115, 0.0
    %v117 = vstv %s58
    %v118 = vmul.f32 %v116, %v117
    %v119 = vadd.f32 %v103, %v118
    %v120 = vstv %s39
    %v121 = vmul.f32 %v63, %v120
    %v122 = vstv %s49
    %v123 = vadd.f32 %v121, %v122
    %v124 = vmax.f32 %v123, 0.0
    %v125 = vstv %s59
    %v126 = vmul.f32 %v124, %v125
    %v127 = vadd.f32 %v111, %v126
    %v128 = vstv %s40
    %v129 = vmul.f32 %v63, %v128
    %v130 = vstv %s50
    %v131 = vadd.f32 %v129, %v130
    %v132 = vmax.f32 %v131, 0.0
    %v133 = vstv %s60
    %v134 = vmul.f32 %v132, %v133
    %v135 = vadd.f32 %v119, %v134
    %v136 = vstv %s41
    %v137 = vmul.f32 %v63, %v136
    %v138 = vstv %s51
    %v139 = vadd.f32 %v137, %v138
    %v140 = vmax.f32 %v139, 0.0
    %v141 = vstv %s61
    %v142 = vmul.f32 %v140, %v141
    %v143 = vadd.f32 %v127, %v142
    %v144 = vadd.f32 %v135, %v143
    %145 = vst [vmem:[#allocation7] sm:$0x1] %v144
    // Predicated region
    $region10: #{tpu_custom_call.1} parent=1 // pred_check
      _
    $region11: #{tpu_custom_call.1} parent=1 // pred_check_branch
      %147 = sbr.rel (0) target = $region13
    $region12: #{tpu_custom_call.1} parent=1 // pred_region
      %149 = vsyncadd [#allocation6], 0
      %s151 = sshll.u32 [#allocation7], 4
      %s152 = int_to_ptr.vmem [resolvable:$true] %s151
      %s153 = sshll.u32 %s2, 4
      %s154 = int_to_ptr.hbm [resolvable:$true] %s153
      %156 = dma.vmem_to_hbm [thread:$0]  %s152, 16, %s154, [#allocation6]
    $region13: #{tpu_custom_call.1} parent=1 // pred_fallthru
      _
    // Predicated region
    $region14: #{tpu_custom_call.1} parent=1 // pred_check
      _
    $region15: #{tpu_custom_call.1} parent=1 // pred_check_branch
      %158 = sbr.rel (0) target = $region17
    $region16: #{tpu_custom_call.1} parent=1 // pred_region
      %160 = dma.done [#allocation6], 16
    $region17: #{tpu_custom_call.1} parent=1 // pred_fallthru
      _
    %161 = vsyncpa [#allocation5], 1
    %162 = vsyncpa [#allocation6], 1

</llo_original>
